<compile_context>
chip_gen: v5e
topology: v5e:2x2
jax: 0.10.0
libtpu: 0.0.40
codegen_flags: <defaults>
</compile_context>

<pallas_src>
import math

import jax
import jax.numpy as jnp
from jax import lax
from jax.experimental import pallas as pl
from jax.experimental.pallas import tpu as pltpu


def _bottleneck_kernel(x_ref, w1b_ref, s1_ref, z1_ref,
                       a_ref, nk_ref, s2_ref, z2_ref,
                       w3b_ref, s3_ref, z3_ref, out_ref):
    """Fused Bottleneck forward for one batch image.

    Layouts (all float32):
      x_ref   : (1, H, W*Ci)      image, channel fastest within the lane dim
      w1b_ref : (W*Ci, W*Cm)      kron(I_W, conv1_weight^T)
      a_ref   : (3, H, H)         row-shift matrices for ky = -1, 0, +1
      nk_ref  : (3, W*Cm, W*Cm)   banded (kx, channel) matrices, one per ky
      w3b_ref : (W*Cm, W*Co)      kron(I_W, conv3_weight^T)
      s*_ref / z*_ref : (1, W*C)  folded BatchNorm scale / shift
      out_ref : (1, H, W*Co)
    """
    dims = (((1,), (0,)), ((), ()))       # contract lhs last dim with rhs first
    f32 = jnp.float32

    x = x_ref[0]                                                   # (H, W*Ci)

    # conv1 (1x1) + bn1 + relu
    h1 = lax.dot_general(x, w1b_ref[...], dims, preferred_element_type=f32)
    h1 = jnp.maximum(h1 * s1_ref[...] + z1_ref[...], 0.0)          # (H, W*Cm)

    # conv2 (3x3, pad=1, stride=1) + bn2 + relu: three ky taps, each one
    # channel/kx-band matmul on the right and one row-shift matmul on the left.
    acc = jnp.zeros_like(h1)
    for t in range(3):                                             # ky = t - 1
        hn = lax.dot_general(h1, nk_ref[t], dims, preferred_element_type=f32)
        acc = acc + lax.dot_general(a_ref[t], hn, dims,
                                    preferred_element_type=f32)
    h2 = jnp.maximum(acc * s2_ref[...] + z2_ref[...], 0.0)         # (H, W*Cm)

    # conv3 (1x1) + bn3 + identity residual + relu
    h3 = lax.dot_general(h2, w3b_ref[...], dims, preferred_element_type=f32)
    h3 = h3 * s3_ref[...] + z3_ref[...]                            # (H, W*Co)
    out_ref[0] = jnp.maximum(h3 + x, 0.0)


def _bn_fold(gamma, beta, mean, var, eps=1e-5):
    s = gamma / jnp.sqrt(var + eps)
    return s, beta - mean * s


def bottleneck_forward(x_nchw, params):
    """Bottleneck forward (module defaults). x_nchw: (N, Ci, H, W) float32."""
    (w1, g1, b1, m1, v1,
     w2, g2, b2, m2, v2,
     w3, g3, b3, m3, v3) = params
    N, Ci, Hs, Ws = x_nchw.shape
    Cm = w1.shape[0]            # width
    Co = w3.shape[0]            # planes * expansion
    assert Co == Ci, "identity residual requires inplanes == planes * expansion"

    # Fold BatchNorm (inference mode) into per-channel scale/shift.
    s1, z1 = _bn_fold(g1, b1, m1, v1)
    s2, z2 = _bn_fold(g2, b2, m2, v2)
    s3, z3 = _bn_fold(g3, b3, m3, v3)

    # Structured weight matrices for the (H, W*C) layout.
    eye_w = jnp.eye(Ws, dtype=jnp.float32)
    w1_blk = jnp.kron(eye_w, w1.T)                               # (W*Ci, W*Cm)
    w3_blk = jnp.kron(eye_w, w3.T)                               # (W*Cm, W*Co)
    a_mats = jnp.stack(
        [jnp.eye(Hs, k=ky, dtype=jnp.float32) for ky in (-1, 0, 1)])  # (3,H,H)
    nk_mats = jnp.stack([
        sum(jnp.kron(jnp.eye(Ws, k=-kx, dtype=jnp.float32),
                     w2[:, :, ky + 1, kx + 1].T)
            for kx in (-1, 0, 1))
        for ky in (-1, 0, 1)])                                   # (3, W*Cm, W*Cm)

    def tile_vec(v):
        return jnp.tile(v.astype(jnp.float32), Ws)[None, :]      # (1, W*C)

    s1v, z1v = tile_vec(s1), tile_vec(z1)
    s2v, z2v = tile_vec(s2), tile_vec(z2)
    s3v, z3v = tile_vec(s3), tile_vec(z3)

    # NCHW -> lane-dense (N, H, W*Ci) with channel fastest.
    x_l = jnp.transpose(x_nchw, (0, 2, 3, 1)).reshape(N, Hs, Ws * Ci)
    x_l = x_l.astype(jnp.float32)

    const2 = lambda n: (0, 0)        # noqa: E731  (resident weight blocks)
    const3 = lambda n: (0, 0, 0)     # noqa: E731

    out_l = pl.pallas_call(
        _bottleneck_kernel,
        out_shape=jax.ShapeDtypeStruct((N, Hs, Ws * Co), jnp.float32),
        grid=(N,),
        in_specs=[
            pl.BlockSpec((1, Hs, Ws * Ci), lambda n: (n, 0, 0)),
            pl.BlockSpec((Ws * Ci, Ws * Cm), const2),
            pl.BlockSpec((1, Ws * Cm), const2),
            pl.BlockSpec((1, Ws * Cm), const2),
            pl.BlockSpec((3, Hs, Hs), const3),
            pl.BlockSpec((3, Ws * Cm, Ws * Cm), const3),
            pl.BlockSpec((1, Ws * Cm), const2),
            pl.BlockSpec((1, Ws * Cm), const2),
            pl.BlockSpec((Ws * Cm, Ws * Co), const2),
            pl.BlockSpec((1, Ws * Co), const2),
            pl.BlockSpec((1, Ws * Co), const2),
        ],
        out_specs=pl.BlockSpec((1, Hs, Ws * Co), lambda n: (n, 0, 0)),
        compiler_params=pltpu.CompilerParams(
            dimension_semantics=("parallel",)),
    )(x_l, w1_blk, s1v, z1v, a_mats, nk_mats, s2v, z2v, w3_blk, s3v, z3v)

    # Back to NCHW.
    return jnp.transpose(out_l.reshape(N, Hs, Ws, Co), (0, 3, 1, 2))


def bottleneck_reference(x, params):
    """Pure-XLA reference (inference-mode BatchNorm), for correctness check."""
    (w1, g1, b1, m1, v1,
     w2, g2, b2, m2, v2,
     w3, g3, b3, m3, v3) = params

    def bn(z, g, b, m, v, eps=1e-5):
        s = g / jnp.sqrt(v + eps)
        return z * s[None, :, None, None] + (b - m * s)[None, :, None, None]

    dn = ('NCHW', 'OIHW', 'NCHW')
    hp = lax.Precision.HIGHEST
    out = lax.conv_general_dilated(x, w1[:, :, None, None], (1, 1), 'VALID',
                                   dimension_numbers=dn, precision=hp)
    out = jax.nn.relu(bn(out, g1, b1, m1, v1))
    out = lax.conv_general_dilated(out, w2, (1, 1), ((1, 1), (1, 1)),
                                   dimension_numbers=dn, precision=hp)
    out = jax.nn.relu(bn(out, g2, b2, m2, v2))
    out = lax.conv_general_dilated(out, w3[:, :, None, None], (1, 1), 'VALID',
                                   dimension_numbers=dn, precision=hp)
    out = bn(out, g3, b3, m3, v3)
    return jax.nn.relu(out + x)


if __name__ == "__main__":
    key = jax.random.PRNGKey(0)
    ks = jax.random.split(key, 8)

    # Small shapes: Bottleneck(inplanes=16, planes=4) on 2 x 16 x 16x16 input.
    N, inplanes, planes, Hs, Ws = 2, 16, 4, 16, 16
    width = planes                     # base_width=64, groups=1
    Co = planes * 4                    # expansion = 4  (== inplanes -> identity)

    x = jax.random.normal(ks[0], (N, inplanes, Hs, Ws), dtype=jnp.float32)

    def conv_weight(k, co, ci, kh, kw):
        fan_in = ci * kh * kw
        return jax.random.normal(k, (co, ci, kh, kw), jnp.float32) / math.sqrt(fan_in)

    w1 = conv_weight(ks[1], width, inplanes, 1, 1)[:, :, 0, 0]    # (Cm, Ci)
    w2 = conv_weight(ks[2], width, width, 3, 3)                   # (Cm, Cm, 3, 3)
    w3 = conv_weight(ks[3], Co, width, 1, 1)[:, :, 0, 0]          # (Co, Cm)

    def bn_params(k, c):
        k1, k2, k3, k4 = jax.random.split(k, 4)
        gamma = 1.0 + 0.1 * jax.random.normal(k1, (c,), jnp.float32)
        beta = 0.1 * jax.random.normal(k2, (c,), jnp.float32)
        mean = 0.1 * jax.random.normal(k3, (c,), jnp.float32)
        var = jax.random.uniform(k4, (c,), jnp.float32, minval=0.5, maxval=1.5)
        return gamma, beta, mean, var

    g1, b1, m1, v1 = bn_params(ks[4], width)
    g2, b2, m2, v2 = bn_params(ks[5], width)
    g3, b3, m3, v3 = bn_params(ks[6], Co)

    params = (w1, g1, b1, m1, v1,
              w2, g2, b2, m2, v2,
              w3, g3, b3, m3, v3)

    out = bottleneck_forward(x, params)
    out = jax.block_until_ready(out)

    ref = bottleneck_reference(x, params)
    ref = jax.block_until_ready(ref)

    assert out.shape == ref.shape, (out.shape, ref.shape)
    max_err = float(jnp.max(jnp.abs(out - ref)))
    assert max_err < 1e-2, f"max abs error vs reference: {max_err}"
    print("KERNEL_OK")
</pallas_src>

<mosaic_0001>
module attributes {stable_mosaic.version = 11 : i64} {
  func.func @_bottleneck_kernel(%arg0: i32, %arg1: memref<1x16x256xf32, #tpu.memory_space<vmem>>, %arg2: memref<256x64xf32, #tpu.memory_space<vmem>>, %arg3: memref<1x64xf32, #tpu.memory_space<vmem>>, %arg4: memref<1x64xf32, #tpu.memory_space<vmem>>, %arg5: memref<3x16x16xf32, #tpu.memory_space<vmem>>, %arg6: memref<3x64x64xf32, #tpu.memory_space<vmem>>, %arg7: memref<1x64xf32, #tpu.memory_space<vmem>>, %arg8: memref<1x64xf32, #tpu.memory_space<vmem>>, %arg9: memref<64x256xf32, #tpu.memory_space<vmem>>, %arg10: memref<1x256xf32, #tpu.memory_space<vmem>>, %arg11: memref<1x256xf32, #tpu.memory_space<vmem>>, %arg12: memref<1x16x256xf32, #tpu.memory_space<vmem>>) attributes {dimension_semantics = [#tpu.dimension_semantics<parallel>], iteration_bounds = array<i64: 2>, scalar_prefetch = 0 : i64, scratch_operands = 0 : i64, tpu.core_type = #tpu.core_type<tc>, window_params = [{transform_indices = @transform_0, window_bounds = array<i64: 1, 16, 256>}, {pipeline_mode = #tpu.pipeline_mode<synchronous>, transform_indices = @transform_1, window_bounds = array<i64: 256, 64>}, {pipeline_mode = #tpu.pipeline_mode<synchronous>, transform_indices = @transform_2, window_bounds = array<i64: 1, 64>}, {pipeline_mode = #tpu.pipeline_mode<synchronous>, transform_indices = @transform_3, window_bounds = array<i64: 1, 64>}, {pipeline_mode = #tpu.pipeline_mode<synchronous>, transform_indices = @transform_4, window_bounds = array<i64: 3, 16, 16>}, {pipeline_mode = #tpu.pipeline_mode<synchronous>, transform_indices = @transform_5, window_bounds = array<i64: 3, 64, 64>}, {pipeline_mode = #tpu.pipeline_mode<synchronous>, transform_indices = @transform_6, window_bounds = array<i64: 1, 64>}, {pipeline_mode = #tpu.pipeline_mode<synchronous>, transform_indices = @transform_7, window_bounds = array<i64: 1, 64>}, {pipeline_mode = #tpu.pipeline_mode<synchronous>, transform_indices = @transform_8, window_bounds = array<i64: 64, 256>}, {pipeline_mode = #tpu.pipeline_mode<synchronous>, transform_indices = @transform_9, window_bounds = array<i64: 1, 256>}, {pipeline_mode = #tpu.pipeline_mode<synchronous>, transform_indices = @transform_10, window_bounds = array<i64: 1, 256>}, {transform_indices = @transform_11, window_bounds = array<i64: 1, 16, 256>}]} {
    %c0 = arith.constant 0 : index
    %c0_0 = arith.constant 0 : index
    %c0_1 = arith.constant 0 : index
    %0 = vector.load %arg1[%c0, %c0_0, %c0_1] : memref<1x16x256xf32, #tpu.memory_space<vmem>>, vector<1x16x256xf32>
    %1 = vector.shape_cast %0 : vector<1x16x256xf32> to vector<16x256xf32>
    %c0_2 = arith.constant 0 : index
    %c0_3 = arith.constant 0 : index
    %2 = vector.load %arg2[%c0_2, %c0_3] : memref<256x64xf32, #tpu.memory_space<vmem>>, vector<256x64xf32>
    %cst = arith.constant dense<0.000000e+00> : vector<16x64xf32>
    %3 = tpu.matmul %1, %2, %cst {dimension_numbers = #tpu.dot_dimension_numbers<[1], [0], [0], [1], [0, 0, 1, 1], [], []>} : vector<16x256xf32>, vector<256x64xf32>, vector<16x64xf32> -> vector<16x64xf32>
    %c0_4 = arith.constant 0 : index
    %c0_5 = arith.constant 0 : index
    %4 = vector.load %arg3[%c0_4, %c0_5] : memref<1x64xf32, #tpu.memory_space<vmem>>, vector<1x64xf32>
    %5 = vector.broadcast %4 : vector<1x64xf32> to vector<16x64xf32>
    %6 = arith.mulf %3, %5 : vector<16x64xf32>
    %c0_6 = arith.constant 0 : index
    %c0_7 = arith.constant 0 : index
    %7 = vector.load %arg4[%c0_6, %c0_7] : memref<1x64xf32, #tpu.memory_space<vmem>>, vector<1x64xf32>
    %8 = vector.broadcast %7 : vector<1x64xf32> to vector<16x64xf32>
    %9 = arith.addf %6, %8 : vector<16x64xf32>
    %cst_8 = arith.constant 0.000000e+00 : f32
    %10 = vector.broadcast %cst_8 : f32 to vector<16x64xf32>
    %11 = arith.maximumf %9, %10 : vector<16x64xf32>
    %cst_9 = arith.constant 0.000000e+00 : f32
    %12 = vector.broadcast %cst_9 : f32 to vector<16x64xf32>
    %c0_10 = arith.constant 0 : index
    %c0_11 = arith.constant 0 : index
    %c0_12 = arith.constant 0 : index
    %13 = vector.load %arg6[%c0_10, %c0_11, %c0_12] : memref<3x64x64xf32, #tpu.memory_space<vmem>>, vector<1x64x64xf32>
    %14 = vector.shape_cast %13 : vector<1x64x64xf32> to vector<64x64xf32>
    %cst_13 = arith.constant dense<0.000000e+00> : vector<16x64xf32>
    %15 = tpu.matmul %11, %14, %cst_13 {dimension_numbers = #tpu.dot_dimension_numbers<[1], [0], [0], [1], [0, 0, 1, 1], [], []>} : vector<16x64xf32>, vector<64x64xf32>, vector<16x64xf32> -> vector<16x64xf32>
    %c0_14 = arith.constant 0 : index
    %c0_15 = arith.constant 0 : index
    %c0_16 = arith.constant 0 : index
    %16 = vector.load %arg5[%c0_14, %c0_15, %c0_16] : memref<3x16x16xf32, #tpu.memory_space<vmem>>, vector<1x16x16xf32>
    %17 = vector.shape_cast %16 : vector<1x16x16xf32> to vector<16x16xf32>
    %cst_17 = arith.constant dense<0.000000e+00> : vector<16x64xf32>
    %18 = tpu.matmul %17, %15, %cst_17 {dimension_numbers = #tpu.dot_dimension_numbers<[1], [0], [0], [1], [0, 0, 1, 1], [], []>} : vector<16x16xf32>, vector<16x64xf32>, vector<16x64xf32> -> vector<16x64xf32>
    %19 = arith.addf %12, %18 : vector<16x64xf32>
    %c1 = arith.constant 1 : index
    %c0_18 = arith.constant 0 : index
    %c0_19 = arith.constant 0 : index
    %20 = vector.load %arg6[%c1, %c0_18, %c0_19] : memref<3x64x64xf32, #tpu.memory_space<vmem>>, vector<1x64x64xf32>
    %21 = vector.shape_cast %20 : vector<1x64x64xf32> to vector<64x64xf32>
    %cst_20 = arith.constant dense<0.000000e+00> : vector<16x64xf32>
    %22 = tpu.matmul %11, %21, %cst_20 {dimension_numbers = #tpu.dot_dimension_numbers<[1], [0], [0], [1], [0, 0, 1, 1], [], []>} : vector<16x64xf32>, vector<64x64xf32>, vector<16x64xf32> -> vector<16x64xf32>
    %c1_21 = arith.constant 1 : index
    %c0_22 = arith.constant 0 : index
    %c0_23 = arith.constant 0 : index
    %23 = vector.load %arg5[%c1_21, %c0_22, %c0_23] : memref<3x16x16xf32, #tpu.memory_space<vmem>>, vector<1x16x16xf32>
    %24 = vector.shape_cast %23 : vector<1x16x16xf32> to vector<16x16xf32>
    %cst_24 = arith.constant dense<0.000000e+00> : vector<16x64xf32>
    %25 = tpu.matmul %24, %22, %cst_24 {dimension_numbers = #tpu.dot_dimension_numbers<[1], [0], [0], [1], [0, 0, 1, 1], [], []>} : vector<16x16xf32>, vector<16x64xf32>, vector<16x64xf32> -> vector<16x64xf32>
    %26 = arith.addf %19, %25 : vector<16x64xf32>
    %c2 = arith.constant 2 : index
    %c0_25 = arith.constant 0 : index
    %c0_26 = arith.constant 0 : index
    %27 = vector.load %arg6[%c2, %c0_25, %c0_26] : memref<3x64x64xf32, #tpu.memory_space<vmem>>, vector<1x64x64xf32>
    %28 = vector.shape_cast %27 : vector<1x64x64xf32> to vector<64x64xf32>
    %cst_27 = arith.constant dense<0.000000e+00> : vector<16x64xf32>
    %29 = tpu.matmul %11, %28, %cst_27 {dimension_numbers = #tpu.dot_dimension_numbers<[1], [0], [0], [1], [0, 0, 1, 1], [], []>} : vector<16x64xf32>, vector<64x64xf32>, vector<16x64xf32> -> vector<16x64xf32>
    %c2_28 = arith.constant 2 : index
    %c0_29 = arith.constant 0 : index
    %c0_30 = arith.constant 0 : index
    %30 = vector.load %arg5[%c2_28, %c0_29, %c0_30] : memref<3x16x16xf32, #tpu.memory_space<vmem>>, vector<1x16x16xf32>
    %31 = vector.shape_cast %30 : vector<1x16x16xf32> to vector<16x16xf32>
    %cst_31 = arith.constant dense<0.000000e+00> : vector<16x64xf32>
    %32 = tpu.matmul %31, %29, %cst_31 {dimension_numbers = #tpu.dot_dimension_numbers<[1], [0], [0], [1], [0, 0, 1, 1], [], []>} : vector<16x16xf32>, vector<16x64xf32>, vector<16x64xf32> -> vector<16x64xf32>
    %33 = arith.addf %26, %32 : vector<16x64xf32>
    %c0_32 = arith.constant 0 : index
    %c0_33 = arith.constant 0 : index
    %34 = vector.load %arg7[%c0_32, %c0_33] : memref<1x64xf32, #tpu.memory_space<vmem>>, vector<1x64xf32>
    %35 = vector.broadcast %34 : vector<1x64xf32> to vector<16x64xf32>
    %36 = arith.mulf %33, %35 : vector<16x64xf32>
    %c0_34 = arith.constant 0 : index
    %c0_35 = arith.constant 0 : index
    %37 = vector.load %arg8[%c0_34, %c0_35] : memref<1x64xf32, #tpu.memory_space<vmem>>, vector<1x64xf32>
    %38 = vector.broadcast %37 : vector<1x64xf32> to vector<16x64xf32>
    %39 = arith.addf %36, %38 : vector<16x64xf32>
    %cst_36 = arith.constant 0.000000e+00 : f32
    %40 = vector.broadcast %cst_36 : f32 to vector<16x64xf32>
    %41 = arith.maximumf %39, %40 : vector<16x64xf32>
    %c0_37 = arith.constant 0 : index
    %c0_38 = arith.constant 0 : index
    %42 = vector.load %arg9[%c0_37, %c0_38] : memref<64x256xf32, #tpu.memory_space<vmem>>, vector<64x256xf32>
    %cst_39 = arith.constant dense<0.000000e+00> : vector<16x256xf32>
    %43 = tpu.matmul %41, %42, %cst_39 {dimension_numbers = #tpu.dot_dimension_numbers<[1], [0], [0], [1], [0, 0, 1, 1], [], []>} : vector<16x64xf32>, vector<64x256xf32>, vector<16x256xf32> -> vector<16x256xf32>
    %c0_40 = arith.constant 0 : index
    %c0_41 = arith.constant 0 : index
    %44 = vector.load %arg10[%c0_40, %c0_41] : memref<1x256xf32, #tpu.memory_space<vmem>>, vector<1x256xf32>
    %45 = vector.broadcast %44 : vector<1x256xf32> to vector<16x256xf32>
    %46 = arith.mulf %43, %45 : vector<16x256xf32>
    %c0_42 = arith.constant 0 : index
    %c0_43 = arith.constant 0 : index
    %47 = vector.load %arg11[%c0_42, %c0_43] : memref<1x256xf32, #tpu.memory_space<vmem>>, vector<1x256xf32>
    %48 = vector.broadcast %47 : vector<1x256xf32> to vector<16x256xf32>
    %49 = arith.addf %46, %48 : vector<16x256xf32>
    %50 = arith.addf %49, %1 : vector<16x256xf32>
    %cst_44 = arith.constant 0.000000e+00 : f32
    %51 = vector.broadcast %cst_44 : f32 to vector<16x256xf32>
    %52 = arith.maximumf %50, %51 : vector<16x256xf32>
    %c0_45 = arith.constant 0 : index
    %c0_46 = arith.constant 0 : index
    %c0_47 = arith.constant 0 : index
    %53 = vector.load %arg12[%c0_45, %c0_46, %c0_47] : memref<1x16x256xf32, #tpu.memory_space<vmem>>, vector<1x16x256xf32>
    %54 = vector.shape_cast %53 : vector<1x16x256xf32> to vector<16x256xf32>
    %55 = vector.shape_cast %52 : vector<16x256xf32> to vector<1x16x256xf32>
    tpu.vector_store %arg12[%c0_45, %c0_46, %c0_47], %55 {strides = array<i32>} : memref<1x16x256xf32, #tpu.memory_space<vmem>>, vector<1x16x256xf32>,
    return
  }
  func.func @transform_0(%arg0: i32) -> (i32, i32, i32) {
    %c0_i32 = arith.constant 0 : i32
    %c0_i32_0 = arith.constant 0 : i32
    %c0_i32_1 = arith.constant 0 : i32
    return %arg0, %c0_i32, %c0_i32_0 : i32, i32, i32
  }
  func.func @transform_1(%arg0: i32) -> (i32, i32) {
    %c0_i32 = arith.constant 0 : i32
    %c0_i32_0 = arith.constant 0 : i32
    %c0_i32_1 = arith.constant 0 : i32
    return %c0_i32, %c0_i32_0 : i32, i32
  }
  func.func @transform_2(%arg0: i32) -> (i32, i32) {
    %c0_i32 = arith.constant 0 : i32
    %c0_i32_0 = arith.constant 0 : i32
    %c0_i32_1 = arith.constant 0 : i32
    return %c0_i32, %c0_i32_0 : i32, i32
  }
  func.func @transform_3(%arg0: i32) -> (i32, i32) {
    %c0_i32 = arith.constant 0 : i32
    %c0_i32_0 = arith.constant 0 : i32
    %c0_i32_1 = arith.constant 0 : i32
    return %c0_i32, %c0_i32_0 : i32, i32
  }
  func.func @transform_4(%arg0: i32) -> (i32, i32, i32) {
    %c0_i32 = arith.constant 0 : i32
    %c0_i32_0 = arith.constant 0 : i32
    %c0_i32_1 = arith.constant 0 : i32
    %c0_i32_2 = arith.constant 0 : i32
    return %c0_i32, %c0_i32_0, %c0_i32_1 : i32, i32, i32
  }
  func.func @transform_5(%arg0: i32) -> (i32, i32, i32) {
    %c0_i32 = arith.constant 0 : i32
    %c0_i32_0 = arith.constant 0 : i32
    %c0_i32_1 = arith.constant 0 : i32
    %c0_i32_2 = arith.constant 0 : i32
    return %c0_i32, %c0_i32_0, %c0_i32_1 : i32, i32, i32
  }
  func.func @transform_6(%arg0: i32) -> (i32, i32) {
    %c0_i32 = arith.constant 0 : i32
    %c0_i32_0 = arith.constant 0 : i32
    %c0_i32_1 = arith.constant 0 : i32
    return %c0_i32, %c0_i32_0 : i32, i32
  }
  func.func @transform_7(%arg0: i32) -> (i32, i32) {
    %c0_i32 = arith.constant 0 : i32
    %c0_i32_0 = arith.constant 0 : i32
    %c0_i32_1 = arith.constant 0 : i32
    return %c0_i32, %c0_i32_0 : i32, i32
  }
  func.func @transform_8(%arg0: i32) -> (i32, i32) {
    %c0_i32 = arith.constant 0 : i32
    %c0_i32_0 = arith.constant 0 : i32
    %c0_i32_1 = arith.constant 0 : i32
    return %c0_i32, %c0_i32_0 : i32, i32
  }
  func.func @transform_9(%arg0: i32) -> (i32, i32) {
    %c0_i32 = arith.constant 0 : i32
    %c0_i32_0 = arith.constant 0 : i32
    %c0_i32_1 = arith.constant 0 : i32
    return %c0_i32, %c0_i32_0 : i32, i32
  }
  func.func @transform_10(%arg0: i32) -> (i32, i32) {
    %c0_i32 = arith.constant 0 : i32
    %c0_i32_0 = arith.constant 0 : i32
    %c0_i32_1 = arith.constant 0 : i32
    return %c0_i32, %c0_i32_0 : i32, i32
  }
  func.func @transform_11(%arg0: i32) -> (i32, i32, i32) {
    %c0_i32 = arith.constant 0 : i32
    %c0_i32_0 = arith.constant 0 : i32
    %c0_i32_1 = arith.constant 0 : i32
    return %arg0, %c0_i32, %c0_i32_0 : i32, i32, i32
  }
}

</mosaic_0001>

<llo_original>
// kernel: tpu_custom_call.1
$region0: #{tpu_custom_call.1}
  #allocation0 [shape = 'u32[]', space=smem, size = 0x4, offset = 0x4, fixed_abs, tag = 'smem constant byte address 0x4 - core index']
  #allocation1 [shape = 'u32[72,128]{1,0:T(1,128)}', space=vmem, size = 0x9000, scoped, tag = 'internal scratch']
  %s0 = inlined_call_operand.vmem [shape: f32[2,16,256], index: 0, kind: input, shape index: {}]
  %s1 = inlined_call_operand.vmem [shape: f32[256,64], index: 1, kind: input, shape index: {}]
  %s2 = inlined_call_operand.hbm [shape: f32[1,64], index: 2, kind: input, shape index: {}]
  %s3 = inlined_call_operand.hbm [shape: f32[1,64], index: 3, kind: input, shape index: {}]
  %s4 = inlined_call_operand.hbm [shape: f32[3,16,16], index: 4, kind: input, shape index: {}]
  %s5 = inlined_call_operand.vmem [shape: f32[3,64,64], index: 5, kind: input, shape index: {}]
  %s6 = inlined_call_operand.hbm [shape: f32[1,64], index: 6, kind: input, shape index: {}]
  %s7 = inlined_call_operand.hbm [shape: f32[1,64], index: 7, kind: input, shape index: {}]
  %s8 = inlined_call_operand.vmem [shape: f32[64,256], index: 8, kind: input, shape index: {}]
  %s9 = inlined_call_operand.vmem [shape: f32[1,256], index: 9, kind: input, shape index: {}]
  %s10 = inlined_call_operand.vmem [shape: f32[1,256], index: 10, kind: input, shape index: {}]
  %s11 = inlined_call_operand.hbm [shape: f32[2,16,256], index: 11, kind: output, shape index: {}]
  %s12 = sld [smem:[#allocation0]]
  $region97: #{tpu_custom_call.1} parent=0
    _
  %s14 = ssub.s32 1, %s12
  %s15 = scalar_select 0, %s14, %s12
  $region1: #{tpu_custom_call.1} parent=0
    #allocation2 [shape = 'u8[512]{0}', space=vmem, size = 0x400, scoped, tag = 'input window, operand 2, single buffered']
    #allocation3 [shape = 's32[2]{0}', space=sflag, size = 0x8, scoped, tag = 'scoped memory for tpu_custom_call.1']
    #allocation4 [shape = 's32[2]{0}', space=sflag, size = 0x8, scoped, tag = 'scoped memory for tpu_custom_call.1']
    #allocation5 [shape = 'u8[512]{0}', space=vmem, size = 0x400, scoped, tag = 'input window, operand 3, single buffered']
    #allocation6 [shape = 's32[1]{0}', space=sflag, size = 0x4, scoped, tag = 'scoped memory for tpu_custom_call.1']
    #allocation7 [shape = 'u8[24576]{0}', space=vmem, size = 0x6000, scoped, tag = 'input window, operand 4, single buffered']
    #allocation8 [shape = 'u8[512]{0}', space=vmem, size = 0x400, scoped, tag = 'input window, operand 6, single buffered']
    #allocation9 [shape = 's32[1]{0}', space=sflag, size = 0x4, scoped, tag = 'scoped memory for tpu_custom_call.1']
    #allocation10 [shape = 'u8[512]{0}', space=vmem, size = 0x400, scoped, tag = 'input window, operand 7, single buffered']
    #allocation11 [shape = 'u8[32768]{0}', space=vmem, size = 0x8000, scoped, tag = 'output window, operand 0']
    %16 = vsyncpa [#allocation3], 0
    %17 = vsyncpa [#allocation6], 0
    %18 = vsyncpa [#allocation9], 0
    %19 = vsyncpa [#allocation4], 0
    %s20 = scalar_lea.sflag [#allocation4], 1
    %21 = vsyncpa %s20, 0
    loop: start=0, step=1, limit=4
    $region2: #{tpu_custom_call.1} parent=1 // loop_pre_header
      _
    $region3: #{tpu_custom_call.1} parent=1 // loop_header
      %s23 = sphi 0, %s27
      %p24 = scmp.ge.s32.totalorder %s23, 4
      %s33 = sphi 0, %s35
      %s36 = sphi 0, %s33
      %s37 = sphi 0, %s36
      %s53 = sphi 0, %s37
      %s57 = sphi 0, %s57
      %s59 = sphi 0, %s57
      %s60 = sphi 0, %s59
      %s74 = sphi 0, %s60
      %s78 = sphi 0, %s78
      %s80 = sphi 0, %s78
      %s81 = sphi 0, %s80
      %s95 = sphi 0, %s81
      %s99 = sphi 0, %s99
      %s101 = sphi 0, %s99
      %s102 = sphi 0, %s101
      %s116 = sphi 0, %s102
      %s120 = sphi 0, %s120
      %s122 = sphi 0, %s120
      %s123 = sphi 0, %s122
      %s137 = sphi 0, %s123
      %s141 = sphi 0, %s141
      %s143 = sphi 0, %s141
      %s144 = sphi 0, %s143
      %s158 = sphi 0, %s144
      %s162 = sphi 0, %s162
      %s164 = sphi 0, %s162
      %s165 = sphi 0, %s164
      %s179 = sphi 0, %s165
      %s183 = sphi 0, %s183
      %s185 = sphi 0, %s183
      %s186 = sphi 0, %s185
      %s200 = sphi 0, %s186
      %s204 = sphi 0, %s204
      %s206 = sphi 0, %s204
      %s207 = sphi 0, %s206
      %s221 = sphi 0, %s207
      %s225 = sphi 0, %s225
      %s227 = sphi 0, %s225
      %s228 = sphi 0, %s227
      %s242 = sphi 0, %s228
      %s246 = sphi 0, %s246
      %s248 = sphi 0, %s246
      %s249 = sphi 0, %s248
      %s263 = sphi 0, %s249
      %s269 = sphi 0, %s271
      %s272 = sphi 0, %s269
      %s273 = sphi 0, %s272
      %s289 = sphi 0, %s273
    $region4: #{tpu_custom_call.1} parent=1 // loop_header_branch
      %26 = sbr.rel (%p24) target = $region8
    $region5: #{tpu_custom_call.1} parent=1 // loop_body
      %s28 = ssub.s32 %s23, 1
      %s29 = ssub.s32 %s23, 2
      %s30 = sadd.s32 %s23, 1
      %s31 = ssub.s32 %s23, %s30
      %p32 = scmp.eq.s32.totalorder %s31, 0
      %s34 = sadd.s32 %s33, 1
      %s35 = scalar_select %p32, %s33, %s34
      %p38 = pneg %p32
      %p39 = scmp.eq.s32.totalorder %s23, 1
      %p40 = por %p38, %p39
      %p41 = scmp.ne.s32.totalorder %s33, %s36
      %p42 = scmp.eq.s32.totalorder %s23, 0
      %p43 = por %p41, %p42
      %p44 = scmp.ne.s32.totalorder %s33, %s36
      %p45 = scmp.eq.s32.totalorder %s28, 1
      %p46 = por %p44, %p45
      %p47 = scmp.ne.s32.totalorder %s36, %s37
      %p48 = scmp.eq.s32.totalorder %s28, 0
      %p49 = por %p47, %p48
      %p50 = scmp.ne.s32.totalorder %s36, %s37
      %p51 = scmp.eq.s32.totalorder %s29, 1
      %p52 = por %p50, %p51
      %p54 = scmp.ne.s32.totalorder %s37, %s53
      %p55 = scmp.eq.s32.totalorder %s29, 0
      %p56 = por %p54, %p55
      %s58 = sadd.s32 %s57, 1
      %p61 = scmp.eq.s32.totalorder %s23, 1
      %p62 = scmp.ne.s32.totalorder %s57, %s59
      %p63 = scmp.eq.s32.totalorder %s23, 0
      %p64 = por %p62, %p63
      %p65 = scmp.ne.s32.totalorder %s57, %s59
      %p66 = scmp.eq.s32.totalorder %s28, 1
      %p67 = por %p65, %p66
      %p68 = scmp.ne.s32.totalorder %s59, %s60
      %p69 = scmp.eq.s32.totalorder %s28, 0
      %p70 = por %p68, %p69
      %p71 = scmp.ne.s32.totalorder %s59, %s60
      %p72 = scmp.eq.s32.totalorder %s29, 1
      %p73 = por %p71, %p72
      %p75 = scmp.ne.s32.totalorder %s60, %s74
      %p76 = scmp.eq.s32.totalorder %s29, 0
      %p77 = por %p75, %p76
      %s79 = sadd.s32 %s78, 1
      %p82 = scmp.eq.s32.totalorder %s23, 1
      %p83 = scmp.ne.s32.totalorder %s78, %s80
      %p84 = scmp.eq.s32.totalorder %s23, 0
      %p85 = por %p83, %p84
      %p86 = scmp.ne.s32.totalorder %s78, %s80
      %p87 = scmp.eq.s32.totalorder %s28, 1
      %p88 = por %p86, %p87
      %p89 = scmp.ne.s32.totalorder %s80, %s81
      %p90 = scmp.eq.s32.totalorder %s28, 0
      %p91 = por %p89, %p90
      %p92 = scmp.ne.s32.totalorder %s80, %s81
      %p93 = scmp.eq.s32.totalorder %s29, 1
      %p94 = por %p92, %p93
      %p96 = scmp.ne.s32.totalorder %s81, %s95
      %p97 = scmp.eq.s32.totalorder %s29, 0
      %p98 = por %p96, %p97
      %s100 = sadd.s32 %s99, 1
      %p103 = scmp.eq.s32.totalorder %s23, 1
      %p104 = scmp.ne.s32.totalorder %s99, %s101
      %p105 = scmp.eq.s32.totalorder %s23, 0
      %p106 = por %p104, %p105
      %p107 = scmp.ne.s32.totalorder %s99, %s101
      %p108 = scmp.eq.s32.totalorder %s28, 1
      %p109 = por %p107, %p108
      %p110 = scmp.ne.s32.totalorder %s101, %s102
      %p111 = scmp.eq.s32.totalorder %s28, 0
      %p112 = por %p110, %p111
      %p113 = scmp.ne.s32.totalorder %s101, %s102
      %p114 = scmp.eq.s32.totalorder %s29, 1
      %p115 = por %p113, %p114
      %p117 = scmp.ne.s32.totalorder %s102, %s116
      %p118 = scmp.eq.s32.totalorder %s29, 0
      %p119 = por %p117, %p118
      %s121 = sadd.s32 %s120, 1
      %p124 = scmp.eq.s32.totalorder %s23, 1
      %p125 = scmp.ne.s32.totalorder %s120, %s122
      %p126 = scmp.eq.s32.totalorder %s23, 0
      %p127 = por %p125, %p126
      %p128 = scmp.ne.s32.totalorder %s120, %s122
      %p129 = scmp.eq.s32.totalorder %s28, 1
      %p130 = por %p128, %p129
      %p131 = scmp.ne.s32.totalorder %s122, %s123
      %p132 = scmp.eq.s32.totalorder %s28, 0
      %p133 = por %p131, %p132
      %p134 = scmp.ne.s32.totalorder %s122, %s123
      %p135 = scmp.eq.s32.totalorder %s29, 1
      %p136 = por %p134, %p135
      %p138 = scmp.ne.s32.totalorder %s123, %s137
      %p139 = scmp.eq.s32.totalorder %s29, 0
      %p140 = por %p138, %p139
      %s142 = sadd.s32 %s141, 1
      %p145 = scmp.eq.s32.totalorder %s23, 1
      %p146 = scmp.ne.s32.totalorder %s141, %s143
      %p147 = scmp.eq.s32.totalorder %s23, 0
      %p148 = por %p146, %p147
      %p149 = scmp.ne.s32.totalorder %s141, %s143
      %p150 = scmp.eq.s32.totalorder %s28, 1
      %p151 = por %p149, %p150
      %p152 = scmp.ne.s32.totalorder %s143, %s144
      %p153 = scmp.eq.s32.totalorder %s28, 0
      %p154 = por %p152, %p153
      %p155 = scmp.ne.s32.totalorder %s143, %s144
      %p156 = scmp.eq.s32.totalorder %s29, 1
      %p157 = por %p155, %p156
      %p159 = scmp.ne.s32.totalorder %s144, %s158
      %p160 = scmp.eq.s32.totalorder %s29, 0
      %p161 = por %p159, %p160
      %s163 = sadd.s32 %s162, 1
      %p166 = scmp.eq.s32.totalorder %s23, 1
      %p167 = scmp.ne.s32.totalorder %s162, %s164
      %p168 = scmp.eq.s32.totalorder %s23, 0
      %p169 = por %p167, %p168
      %p170 = scmp.ne.s32.totalorder %s162, %s164
      %p171 = scmp.eq.s32.totalorder %s28, 1
      %p172 = por %p170, %p171
      %p173 = scmp.ne.s32.totalorder %s164, %s165
      %p174 = scmp.eq.s32.totalorder %s28, 0
      %p175 = por %p173, %p174
      %p176 = scmp.ne.s32.totalorder %s164, %s165
      %p177 = scmp.eq.s32.totalorder %s29, 1
      %p178 = por %p176, %p177
      %p180 = scmp.ne.s32.totalorder %s165, %s179
      %p181 = scmp.eq.s32.totalorder %s29, 0
      %p182 = por %p180, %p181
      %s184 = sadd.s32 %s183, 1
      %p187 = scmp.eq.s32.totalorder %s23, 1
      %p188 = scmp.ne.s32.totalorder %s183, %s185
      %p189 = scmp.eq.s32.totalorder %s23, 0
      %p190 = por %p188, %p189
      %p191 = scmp.ne.s32.totalorder %s183, %s185
      %p192 = scmp.eq.s32.totalorder %s28, 1
      %p193 = por %p191, %p192
      %p194 = scmp.ne.s32.totalorder %s185, %s186
      %p195 = scmp.eq.s32.totalorder %s28, 0
      %p196 = por %p194, %p195
      %p197 = scmp.ne.s32.totalorder %s185, %s186
      %p198 = scmp.eq.s32.totalorder %s29, 1
      %p199 = por %p197, %p198
      %p201 = scmp.ne.s32.totalorder %s186, %s200
      %p202 = scmp.eq.s32.totalorder %s29, 0
      %p203 = por %p201, %p202
      %s205 = sadd.s32 %s204, 1
      %p208 = scmp.eq.s32.totalorder %s23, 1
      %p209 = scmp.ne.s32.totalorder %s204, %s206
      %p210 = scmp.eq.s32.totalorder %s23, 0
      %p211 = por %p209, %p210
      %p212 = scmp.ne.s32.totalorder %s204, %s206
      %p213 = scmp.eq.s32.totalorder %s28, 1
      %p214 = por %p212, %p213
      %p215 = scmp.ne.s32.totalorder %s206, %s207
      %p216 = scmp.eq.s32.totalorder %s28, 0
      %p217 = por %p215, %p216
      %p218 = scmp.ne.s32.totalorder %s206, %s207
      %p219 = scmp.eq.s32.totalorder %s29, 1
      %p220 = por %p218, %p219
      %p222 = scmp.ne.s32.totalorder %s207, %s221
      %p223 = scmp.eq.s32.totalorder %s29, 0
      %p224 = por %p222, %p223
      %s226 = sadd.s32 %s225, 1
      %p229 = scmp.eq.s32.totalorder %s23, 1
      %p230 = scmp.ne.s32.totalorder %s225, %s227
      %p231 = scmp.eq.s32.totalorder %s23, 0
      %p232 = por %p230, %p231
      %p233 = scmp.ne.s32.totalorder %s225, %s227
      %p234 = scmp.eq.s32.totalorder %s28, 1
      %p235 = por %p233, %p234
      %p236 = scmp.ne.s32.totalorder %s227, %s228
      %p237 = scmp.eq.s32.totalorder %s28, 0
      %p238 = por %p236, %p237
      %p239 = scmp.ne.s32.totalorder %s227, %s228
      %p240 = scmp.eq.s32.totalorder %s29, 1
      %p241 = por %p239, %p240
      %p243 = scmp.ne.s32.totalorder %s228, %s242
      %p244 = scmp.eq.s32.totalorder %s29, 0
      %p245 = por %p243, %p244
      %s247 = sadd.s32 %s246, 1
      %p250 = scmp.eq.s32.totalorder %s23, 1
      %p251 = scmp.ne.s32.totalorder %s246, %s248
      %p252 = scmp.eq.s32.totalorder %s23, 0
      %p253 = por %p251, %p252
      %p254 = scmp.ne.s32.totalorder %s246, %s248
      %p255 = scmp.eq.s32.totalorder %s28, 1
      %p256 = por %p254, %p255
      %p257 = scmp.ne.s32.totalorder %s248, %s249
      %p258 = scmp.eq.s32.totalorder %s28, 0
      %p259 = por %p257, %p258
      %p260 = scmp.ne.s32.totalorder %s248, %s249
      %p261 = scmp.eq.s32.totalorder %s29, 1
      %p262 = por %p260, %p261
      %p264 = scmp.ne.s32.totalorder %s249, %s263
      %p265 = scmp.eq.s32.totalorder %s29, 0
      %p266 = por %p264, %p265
      %s267 = ssub.s32 %s23, %s30
      %p268 = scmp.eq.s32.totalorder %s267, 0
      %s270 = sadd.s32 %s269, 1
      %s271 = scalar_select %p268, %s269, %s270
      %p274 = pneg %p268
      %p275 = scmp.eq.s32.totalorder %s23, 1
      %p276 = por %p274, %p275
      %p277 = scmp.ne.s32.totalorder %s269, %s272
      %p278 = scmp.eq.s32.totalorder %s23, 0
      %p279 = por %p277, %p278
      %p280 = scmp.ne.s32.totalorder %s269, %s272
      %p281 = scmp.eq.s32.totalorder %s28, 1
      %p282 = por %p280, %p281
      %p283 = scmp.ne.s32.totalorder %s272, %s273
      %p284 = scmp.eq.s32.totalorder %s28, 0
      %p285 = por %p283, %p284
      %p286 = scmp.ne.s32.totalorder %s272, %s273
      %p287 = scmp.eq.s32.totalorder %s29, 1
      %p288 = por %p286, %p287
      %p290 = scmp.ne.s32.totalorder %s273, %s289
      %p291 = scmp.eq.s32.totalorder %s29, 0
      %p292 = por %p290, %p291
      %p293 = scmp.le.s32.totalorder 1, %s23
      %p294 = scmp.lt.s32.totalorder %s23, 3
      %p295 = pnand %p293, %p294
      %p296 = pneg %p295
      // Predicated region
      $region9: #{tpu_custom_call.1} parent=5 // pred_check
        _
      $region10: #{tpu_custom_call.1} parent=5 // pred_check_branch
        %298 = sbr.rel (%p295) target = $region12
      $region11: #{tpu_custom_call.1} parent=5 // pred_region
        %s299 = ssub.s32 %s23, 1
        // Predicated region
        $region13: #{tpu_custom_call.1} parent=11 // pred_check
          %p300 = pneg %p70
        $region14: #{tpu_custom_call.1} parent=11 // pred_check_branch
          %302 = sbr.rel (%p300) target = $region16
        $region15: #{tpu_custom_call.1} parent=11 // pred_region
          _
        $region16: #{tpu_custom_call.1} parent=11 // pred_fallthru
          _
        // Predicated region
        $region17: #{tpu_custom_call.1} parent=11 // pred_check
          %p303 = pneg %p91
        $region18: #{tpu_custom_call.1} parent=11 // pred_check_branch
          %305 = sbr.rel (%p303) target = $region20
        $region19: #{tpu_custom_call.1} parent=11 // pred_region
          %307 = vsyncadd [#allocation3], 0
          %s309 = sshll.u32 %s2, 4
          %s310 = int_to_ptr.hbm [resolvable:$true] %s309
          %s311 = sshll.u32 [#allocation2], 4
          %s312 = int_to_ptr.vmem [resolvable:$true] %s311
          %314 = dma.hbm_to_vmem [thread:$0]  %s310, 16, %s312, [#allocation3]
        $region20: #{tpu_custom_call.1} parent=11 // pred_fallthru
          _
        // Predicated region
        $region21: #{tpu_custom_call.1} parent=11 // pred_check
          %p315 = pneg %p112
        $region22: #{tpu_custom_call.1} parent=11 // pred_check_branch
          %317 = sbr.rel (%p315) target = $region24
        $region23: #{tpu_custom_call.1} parent=11 // pred_region
          %319 = vsyncadd [#allocation6], 0
          %s321 = sshll.u32 %s3, 4
          %s322 = int_to_ptr.hbm [resolvable:$true] %s321
          %s323 = sshll.u32 [#allocation5], 4
          %s324 = int_to_ptr.vmem [resolvable:$true] %s323
          %326 = dma.hbm_to_vmem [thread:$0]  %s322, 16, %s324, [#allocation6]
        $region24: #{tpu_custom_call.1} parent=11 // pred_fallthru
          _
        // Predicated region
        $region25: #{tpu_custom_call.1} parent=11 // pred_check
          %p327 = pneg %p133
        $region26: #{tpu_custom_call.1} parent=11 // pred_check_branch
          %329 = sbr.rel (%p327) target = $region28
        $region27: #{tpu_custom_call.1} parent=11 // pred_region
          %331 = vsyncadd [#allocation6], 0
          %s332 = sshll.u32 %s4, 4
          %s333 = int_to_ptr.hbm [resolvable:$true] %s332
          %s334 = sshll.u32 [#allocation7], 4
          %s335 = int_to_ptr.vmem [resolvable:$true] %s334
          %340 = dma.hbm_to_vmem [thread:$0]  %s333, 768, %s335, [#allocation6], 128, 128, 8
        $region28: #{tpu_custom_call.1} parent=11 // pred_fallthru
          _
        // Predicated region
        $region29: #{tpu_custom_call.1} parent=11 // pred_check
          %p341 = pneg %p154
        $region30: #{tpu_custom_call.1} parent=11 // pred_check_branch
          %343 = sbr.rel (%p341) target = $region32
        $region31: #{tpu_custom_call.1} parent=11 // pred_region
          _
        $region32: #{tpu_custom_call.1} parent=11 // pred_fallthru
          _
        // Predicated region
        $region33: #{tpu_custom_call.1} parent=11 // pred_check
          %p344 = pneg %p175
        $region34: #{tpu_custom_call.1} parent=11 // pred_check_branch
          %346 = sbr.rel (%p344) target = $region36
        $region35: #{tpu_custom_call.1} parent=11 // pred_region
          %348 = vsyncadd [#allocation9], 0
          %s350 = sshll.u32 %s6, 4
          %s351 = int_to_ptr.hbm [resolvable:$true] %s350
          %s352 = sshll.u32 [#allocation8], 4
          %s353 = int_to_ptr.vmem [resolvable:$true] %s352
          %355 = dma.hbm_to_vmem [thread:$0]  %s351, 16, %s353, [#allocation9]
        $region36: #{tpu_custom_call.1} parent=11 // pred_fallthru
          _
        // Predicated region
        $region37: #{tpu_custom_call.1} parent=11 // pred_check
          %p356 = pneg %p196
        $region38: #{tpu_custom_call.1} parent=11 // pred_check_branch
          %358 = sbr.rel (%p356) target = $region40
        $region39: #{tpu_custom_call.1} parent=11 // pred_region
          %360 = vsyncadd [#allocation9], 0
          %s362 = sshll.u32 %s7, 4
          %s363 = int_to_ptr.hbm [resolvable:$true] %s362
          %s364 = sshll.u32 [#allocation10], 4
          %s365 = int_to_ptr.vmem [resolvable:$true] %s364
          %367 = dma.hbm_to_vmem [thread:$0]  %s363, 16, %s365, [#allocation9]
        $region40: #{tpu_custom_call.1} parent=11 // pred_fallthru
          _
        // Predicated region
        $region41: #{tpu_custom_call.1} parent=11 // pred_check
          %p368 = pneg %p217
        $region42: #{tpu_custom_call.1} parent=11 // pred_check_branch
          %370 = sbr.rel (%p368) target = $region44
        $region43: #{tpu_custom_call.1} parent=11 // pred_region
          _
        $region44: #{tpu_custom_call.1} parent=11 // pred_fallthru
          _
        // Predicated region
        $region45: #{tpu_custom_call.1} parent=11 // pred_check
          %p371 = pneg %p238
        $region46: #{tpu_custom_call.1} parent=11 // pred_check_branch
          %373 = sbr.rel (%p371) target = $region48
        $region47: #{tpu_custom_call.1} parent=11 // pred_region
          _
        $region48: #{tpu_custom_call.1} parent=11 // pred_fallthru
          _
        // Predicated region
        $region49: #{tpu_custom_call.1} parent=11 // pred_check
          %p374 = pneg %p259
        $region50: #{tpu_custom_call.1} parent=11 // pred_check_branch
          %376 = sbr.rel (%p374) target = $region52
        $region51: #{tpu_custom_call.1} parent=11 // pred_region
          _
        $region52: #{tpu_custom_call.1} parent=11 // pred_fallthru
          _
      $region12: #{tpu_custom_call.1} parent=5 // pred_fallthru
        _
      %p377 = scmp.lt.s32.totalorder %s23, 2
      // Predicated region
      $region53: #{tpu_custom_call.1} parent=5 // pred_check
        %p378 = pneg %p377
      $region54: #{tpu_custom_call.1} parent=5 // pred_check_branch
        %380 = sbr.rel (%p378) target = $region56
      $region55: #{tpu_custom_call.1} parent=5 // pred_region
        // Predicated region
        $region57: #{tpu_custom_call.1} parent=55 // pred_check
          %p381 = pneg %p43
        $region58: #{tpu_custom_call.1} parent=55 // pred_check_branch
          %383 = sbr.rel (%p381) target = $region60
        $region59: #{tpu_custom_call.1} parent=55 // pred_region
          %p384 = scmp.lt.s32.totalorder %s23, 1
          %s385 = scalar_select %p384, %s23, 1
          %s386 = smul.addr %s385, 4
          %s387 = smul.addr %s386, 8
          %s388 = scalar_lea.vmem %s0, %s387
        $region60: #{tpu_custom_call.1} parent=55 // pred_fallthru
          _
      $region56: #{tpu_custom_call.1} parent=5 // pred_fallthru
        _
      %p389 = scmp.le.s32.totalorder 1, %s23
      %p390 = scmp.lt.s32.totalorder %s23, 3
      %p391 = pnand %p389, %p390
      %p392 = pneg %p391
      // Predicated region
      $region61: #{tpu_custom_call.1} parent=5 // pred_check
        _
      $region62: #{tpu_custom_call.1} parent=5 // pred_check_branch
        %394 = sbr.rel (%p391) target = $region64
      $region63: #{tpu_custom_call.1} parent=5 // pred_region
        %s395 = ssub.s32 %s23, 1
        // Predicated region
        $region65: #{tpu_custom_call.1} parent=63 // pred_check
          %p396 = pneg %p91
        $region66: #{tpu_custom_call.1} parent=63 // pred_check_branch
          %398 = sbr.rel (%p396) target = $region68
        $region67: #{tpu_custom_call.1} parent=63 // pred_region
          %400 = dma.done [#allocation3], 16
        $region68: #{tpu_custom_call.1} parent=63 // pred_fallthru
          _
        // Predicated region
        $region69: #{tpu_custom_call.1} parent=63 // pred_check
          %p401 = pneg %p112
        $region70: #{tpu_custom_call.1} parent=63 // pred_check_branch
          %403 = sbr.rel (%p401) target = $region72
        $region71: #{tpu_custom_call.1} parent=63 // pred_region
          %405 = dma.done [#allocation6], 16
        $region72: #{tpu_custom_call.1} parent=63 // pred_fallthru
          _
        // Predicated region
        $region73: #{tpu_custom_call.1} parent=63 // pred_check
          %p406 = pneg %p133
        $region74: #{tpu_custom_call.1} parent=63 // pred_check_branch
          %408 = sbr.rel (%p406) target = $region76
        $region75: #{tpu_custom_call.1} parent=63 // pred_region
          %410 = dma.done [#allocation6], 768
        $region76: #{tpu_custom_call.1} parent=63 // pred_fallthru
          _
        // Predicated region
        $region77: #{tpu_custom_call.1} parent=63 // pred_check
          %p411 = pneg %p175
        $region78: #{tpu_custom_call.1} parent=63 // pred_check_branch
          %413 = sbr.rel (%p411) target = $region80
        $region79: #{tpu_custom_call.1} parent=63 // pred_region
          %415 = dma.done [#allocation9], 16
        $region80: #{tpu_custom_call.1} parent=63 // pred_fallthru
          _
        // Predicated region
        $region81: #{tpu_custom_call.1} parent=63 // pred_check
          %p416 = pneg %p196
        $region82: #{tpu_custom_call.1} parent=63 // pred_check_branch
          %418 = sbr.rel (%p416) target = $region84
        $region83: #{tpu_custom_call.1} parent=63 // pred_region
          %420 = dma.done [#allocation9], 16
        $region84: #{tpu_custom_call.1} parent=63 // pred_fallthru
          _
        %p421 = scmp.lt.s32.totalorder %s28, 1
        %s422 = scalar_select %p421, %s28, 1
        %s423 = smul.addr %s422, 4
        %s424 = smul.addr %s423, 8
        %s425 = scalar_lea.vmem %s0, %s424
        %p426 = pneg %p49
        %p427 = pneg %p46
        %p428 = pneg %p70
        %p429 = pneg %p67
        %p430 = pneg %p91
        %p431 = pneg %p88
        %p432 = pneg %p112
        %p433 = pneg %p109
        %p434 = pneg %p133
        %p435 = pneg %p130
        %p436 = pneg %p154
        %p437 = pneg %p151
        %p438 = pneg %p175
        %p439 = pneg %p172
        %p440 = pneg %p196
        %p441 = pneg %p193
        %p442 = pneg %p217
        %p443 = pneg %p214
        %p444 = pneg %p238
        %p445 = pneg %p235
        %p446 = pneg %p259
        %p447 = pneg %p256
        %p448 = pneg %p285
        %p449 = pneg %p282
        %s450 = sand.u32 %s272, 1
        %s451 = scalar_lea.sflag [#allocation4], %s450
        %s452 = sand.u32 %s272, 1
        %s453 = smul.addr %s452, 32
        %s454 = scalar_lea.vmem [#allocation11], %s453
        %p455 = scmp.lt.s32.totalorder %s28, 1
        %s456 = scalar_select %p455, %s28, 1
        %s457 = smul.addr %s456, 4
        %s458 = smul.addr %s457, 8
        %s459 = scalar_lea.vmem %s0, %s458
        %v460 = vld [vmem:[%s459] sm:$0xff]
        %v461 = vld [vmem:[%s459 + $0x8] sm:$0xff]
        %v462 = vld [vmem:[%s459 + $0x10] sm:$0xff]
        %v463 = vld [vmem:[%s459 + $0x18] sm:$0xff]
        %v464 = vld [vmem:[%s1] sm:$0xff]
        %v465 = vld [vmem:[%s1 + $0x8] sm:$0xff]
        %v466 = vld [vmem:[%s1 + $0x10] sm:$0xff]
        %v467 = vld [vmem:[%s1 + $0x18] sm:$0xff]
        %v468 = vld [vmem:[%s1 + $0x20] sm:$0xff]
        %v469 = vld [vmem:[%s1 + $0x28] sm:$0xff]
        %v470 = vld [vmem:[%s1 + $0x30] sm:$0xff]
        %v471 = vld [vmem:[%s1 + $0x38] sm:$0xff]
        %v472 = vld [vmem:[%s1 + $0x40] sm:$0xff]
        %v473 = vld [vmem:[%s1 + $0x48] sm:$0xff]
        %v474 = vld [vmem:[%s1 + $0x50] sm:$0xff]
        %v475 = vld [vmem:[%s1 + $0x58] sm:$0xff]
        %v476 = vld [vmem:[%s1 + $0x60] sm:$0xff]
        %v477 = vld [vmem:[%s1 + $0x68] sm:$0xff]
        %v478 = vld [vmem:[%s1 + $0x70] sm:$0xff]
        %v479 = vld [vmem:[%s1 + $0x78] sm:$0xff]
        %v480 = vld [vmem:[%s1 + $0x80] sm:$0xff]
        %v481 = vld [vmem:[%s1 + $0x88] sm:$0xff]
        %v482 = vld [vmem:[%s1 + $0x90] sm:$0xff]
        %v483 = vld [vmem:[%s1 + $0x98] sm:$0xff]
        %v484 = vld [vmem:[%s1 + $0xa0] sm:$0xff]
        %v485 = vld [vmem:[%s1 + $0xa8] sm:$0xff]
        %v486 = vld [vmem:[%s1 + $0xb0] sm:$0xff]
        %v487 = vld [vmem:[%s1 + $0xb8] sm:$0xff]
        %v488 = vld [vmem:[%s1 + $0xc0] sm:$0xff]
        %v489 = vld [vmem:[%s1 + $0xc8] sm:$0xff]
        %v490 = vld [vmem:[%s1 + $0xd0] sm:$0xff]
        %v491 = vld [vmem:[%s1 + $0xd8] sm:$0xff]
        %v492 = vld [vmem:[%s1 + $0xe0] sm:$0xff]
        %v493 = vld [vmem:[%s1 + $0xe8] sm:$0xff]
        %v494 = vld [vmem:[%s1 + $0xf0] sm:$0xff]
        %v495 = vld [vmem:[%s1 + $0xf8] sm:$0xff]
        %496 = vmatpush.msra.mxu0 %v479
        %497 = vmatpush.msra.mxu0 %v478
        %498 = vmatpush.msra.mxu0 %v477
        %499 = vmatpush.msra.mxu0 %v476
        %500 = vmatpush.msra.mxu0 %v475
        %501 = vmatpush.msra.mxu0 %v474
        %502 = vmatpush.msra.mxu0 %v473
        %503 = vmatpush.msra.mxu0 %v472
        %504 = vmatpush.msra.mxu0 %v471
        %505 = vmatpush.msra.mxu0 %v470
        %506 = vmatpush.msra.mxu0 %v469
        %507 = vmatpush.msra.mxu0 %v468
        %508 = vmatpush.msra.mxu0 %v467
        %509 = vmatpush.msra.mxu0 %v466
        %510 = vmatpush.msra.mxu0 %v465
        %511 = vmatpush.msra.mxu0 %v464
        %512 = vmatmul.f32.gmra.mxu0 %v460
        %v513 = vpop.f32.mrf.mxu0
        %v514 = vadd.f32 0.0, %v513
        %515 = vmatmul.f32.gmra.mxu0 %v462
        %v516 = vpop.f32.mrf.mxu0
        %v517 = vadd.f32 0.0, %v516
        %518 = vdwg.mxu0
        %519 = vmatpush.msra.mxu0 %v495
        %520 = vmatpush.msra.mxu0 %v494
        %521 = vmatpush.msra.mxu0 %v493
        %522 = vmatpush.msra.mxu0 %v492
        %523 = vmatpush.msra.mxu0 %v491
        %524 = vmatpush.msra.mxu0 %v490
        %525 = vmatpush.msra.mxu0 %v489
        %526 = vmatpush.msra.mxu0 %v488
        %527 = vmatpush.msra.mxu0 %v487
        %528 = vmatpush.msra.mxu0 %v486
        %529 = vmatpush.msra.mxu0 %v485
        %530 = vmatpush.msra.mxu0 %v484
        %531 = vmatpush.msra.mxu0 %v483
        %532 = vmatpush.msra.mxu0 %v482
        %533 = vmatpush.msra.mxu0 %v481
        %534 = vmatpush.msra.mxu0 %v480
        %535 = vmatmul.f32.gmra.mxu0 %v461
        %v536 = vpop.f32.mrf.mxu0
        %v537 = vadd.f32 %v514, %v536
        %538 = vmatmul.f32.gmra.mxu0 %v463
        %v539 = vpop.f32.mrf.mxu0
        %v540 = vadd.f32 %v517, %v539
        %541 = vdwg.mxu0
        %v542 = vld [vmem:[#allocation2] sm:$0x1]
        %v544 = vperm.slane %v542, 0
        %v546 = vmul.f32 %v537, %v544
        %v547 = vmul.f32 %v540, %v544
        %v548 = vld [vmem:[#allocation5] sm:$0x1]
        %v550 = vperm.slane %v548, 0
        %v552 = vadd.f32 %v546, %v550
        %v553 = vadd.f32 %v547, %v550
        %v554 = vmax.f32 %v552, 0.0
        %v555 = vmax.f32 %v553, 0.0
        %v556 = vld [vmem:[%s5] sm:$0xff]
        %v557 = vld [vmem:[%s5 + $0x8] sm:$0xff]
        %v558 = vld [vmem:[%s5 + $0x10] sm:$0xff]
        %v559 = vld [vmem:[%s5 + $0x18] sm:$0xff]
        %v560 = vld [vmem:[%s5 + $0x20] sm:$0xff]
        %v561 = vld [vmem:[%s5 + $0x28] sm:$0xff]
        %v562 = vld [vmem:[%s5 + $0x30] sm:$0xff]
        %v563 = vld [vmem:[%s5 + $0x38] sm:$0xff]
        %vm564 = vcmask 523264
        %v566 = vsel %vm564, %v554, 0
        %v569 = vsel %vm564, %v555, 0
        %571 = vmatpush.msra.mxu0 0.0
        %572 = vmatpush.msra.mxu0 0.0
        %573 = vmatpush.msra.mxu0 0.0
        %574 = vmatpush.msra.mxu0 0.0
        %575 = vmatpush.msra.mxu0 0.0
        %576 = vmatpush.msra.mxu0 0.0
        %577 = vmatpush.msra.mxu0 0.0
        %578 = vmatpush.msra.mxu0 0.0
        %579 = vmatpush.msra.mxu0 %v563
        %580 = vmatpush.msra.mxu0 %v562
        %581 = vmatpush.msra.mxu0 %v561
        %582 = vmatpush.msra.mxu0 %v560
        %583 = vmatpush.msra.mxu0 %v559
        %584 = vmatpush.msra.mxu0 %v558
        %585 = vmatpush.msra.mxu0 %v557
        %586 = vmatpush.msra.mxu0 %v556
        %587 = vmatmul.f32.gmra.mxu0 %v566
        %v588 = vpop.f32.mrf.mxu0
        %v589 = vadd.f32 0.0, %v588
        %590 = vmatmul.f32.gmra.mxu0 %v569
        %v591 = vpop.f32.mrf.mxu0
        %v592 = vadd.f32 0.0, %v591
        %593 = vdwg.mxu0
        %v594 = vld [vmem:[#allocation7] sm:$0xff]
        %v595 = vld [vmem:[#allocation7 + $0x8] sm:$0xff]
        %s596 = scalar_lea.vmem %s5, 64
        %v597 = vld [vmem:[%s596] sm:$0xff]
        %v598 = vld [vmem:[%s596 + $0x8] sm:$0xff]
        %v599 = vld [vmem:[%s596 + $0x10] sm:$0xff]
        %v600 = vld [vmem:[%s596 + $0x18] sm:$0xff]
        %v601 = vld [vmem:[%s596 + $0x20] sm:$0xff]
        %v602 = vld [vmem:[%s596 + $0x28] sm:$0xff]
        %v603 = vld [vmem:[%s596 + $0x30] sm:$0xff]
        %v604 = vld [vmem:[%s596 + $0x38] sm:$0xff]
        %605 = vmatpush.msra.mxu0 0.0
        %606 = vmatpush.msra.mxu0 0.0
        %607 = vmatpush.msra.mxu0 0.0
        %608 = vmatpush.msra.mxu0 0.0
        %609 = vmatpush.msra.mxu0 0.0
        %610 = vmatpush.msra.mxu0 0.0
        %611 = vmatpush.msra.mxu0 0.0
        %612 = vmatpush.msra.mxu0 0.0
        %613 = vmatpush.msra.mxu0 %v604
        %614 = vmatpush.msra.mxu0 %v603
        %615 = vmatpush.msra.mxu0 %v602
        %616 = vmatpush.msra.mxu0 %v601
        %617 = vmatpush.msra.mxu0 %v600
        %618 = vmatpush.msra.mxu0 %v599
        %619 = vmatpush.msra.mxu0 %v598
        %620 = vmatpush.msra.mxu0 %v597
        %621 = vmatmul.f32.gmra.mxu0 %v566
        %v622 = vpop.f32.mrf.mxu0
        %v623 = vadd.f32 0.0, %v622
        %624 = vmatmul.f32.gmra.mxu0 %v569
        %v625 = vpop.f32.mrf.mxu0
        %v626 = vadd.f32 0.0, %v625
        %627 = vdwg.mxu0
        %s628 = scalar_lea.vmem [#allocation7], 16
        %v629 = vld [vmem:[%s628] sm:$0xff]
        %v630 = vld [vmem:[%s628 + $0x8] sm:$0xff]
        %vm631 = vcmask 130048
        %v633 = vsel %vm631, %v629, 0
        %v636 = vsel %vm631, %v630, 0
        %638 = vmatpush.msra.mxu0 0.0
        %639 = vmatpush.msra.mxu0 0.0
        %640 = vmatpush.msra.mxu0 0.0
        %641 = vmatpush.msra.mxu0 0.0
        %642 = vmatpush.msra.mxu0 0.0
        %643 = vmatpush.msra.mxu0 0.0
        %644 = vmatpush.msra.mxu0 0.0
        %645 = vmatpush.msra.mxu0 0.0
        %646 = vmatpush.msra.mxu0 0.0
        %647 = vmatpush.msra.mxu0 0.0
        %648 = vmatpush.msra.mxu0 0.0
        %649 = vmatpush.msra.mxu0 0.0
        %650 = vmatpush.msra.mxu0 0.0
        %651 = vmatpush.msra.mxu0 0.0
        %652 = vmatpush.msra.mxu0 %v626
        %653 = vmatpush.msra.mxu0 %v623
        %654 = vmatmul.f32.gmra.mxu0 %v633
        %v655 = vpop.f32.mrf.mxu0
        %v656 = vadd.f32 0.0, %v655
        %657 = vmatmul.f32.gmra.mxu0 %v636
        %v658 = vpop.f32.mrf.mxu0
        %v659 = vadd.f32 0.0, %v658
        %660 = vdwg.mxu0
        %v662 = vsel %vm631, %v594, 0
        %v665 = vsel %vm631, %v595, 0
        %667 = vmatpush.msra.mxu0 0.0
        %668 = vmatpush.msra.mxu0 0.0
        %669 = vmatpush.msra.mxu0 0.0
        %670 = vmatpush.msra.mxu0 0.0
        %671 = vmatpush.msra.mxu0 0.0
        %672 = vmatpush.msra.mxu0 0.0
        %673 = vmatpush.msra.mxu0 0.0
        %674 = vmatpush.msra.mxu0 0.0
        %675 = vmatpush.msra.mxu0 0.0
        %676 = vmatpush.msra.mxu0 0.0
        %677 = vmatpush.msra.mxu0 0.0
        %678 = vmatpush.msra.mxu0 0.0
        %679 = vmatpush.msra.mxu0 0.0
        %680 = vmatpush.msra.mxu0 0.0
        %681 = vmatpush.msra.mxu0 %v592
        %682 = vmatpush.msra.mxu0 %v589
        %683 = vmatmul.f32.gmra.mxu0 %v662
        %v684 = vpop.f32.mrf.mxu0
        %v685 = vadd.f32 %v656, %v684
        %686 = vmatmul.f32.gmra.mxu0 %v665
        %v687 = vpop.f32.mrf.mxu0
        %v688 = vadd.f32 %v659, %v687
        %689 = vdwg.mxu0
        %s690 = scalar_lea.vmem %s5, 128
        %v691 = vld [vmem:[%s690] sm:$0xff]
        %v692 = vld [vmem:[%s690 + $0x8] sm:$0xff]
        %v693 = vld [vmem:[%s690 + $0x10] sm:$0xff]
        %v694 = vld [vmem:[%s690 + $0x18] sm:$0xff]
        %v695 = vld [vmem:[%s690 + $0x20] sm:$0xff]
        %v696 = vld [vmem:[%s690 + $0x28] sm:$0xff]
        %v697 = vld [vmem:[%s690 + $0x30] sm:$0xff]
        %v698 = vld [vmem:[%s690 + $0x38] sm:$0xff]
        %699 = vmatpush.msra.mxu0 0.0
        %700 = vmatpush.msra.mxu0 0.0
        %701 = vmatpush.msra.mxu0 0.0
        %702 = vmatpush.msra.mxu0 0.0
        %703 = vmatpush.msra.mxu0 0.0
        %704 = vmatpush.msra.mxu0 0.0
        %705 = vmatpush.msra.mxu0 0.0
        %706 = vmatpush.msra.mxu0 0.0
        %707 = vmatpush.msra.mxu0 %v698
        %708 = vmatpush.msra.mxu0 %v697
        %709 = vmatpush.msra.mxu0 %v696
        %710 = vmatpush.msra.mxu0 %v695
        %711 = vmatpush.msra.mxu0 %v694
        %712 = vmatpush.msra.mxu0 %v693
        %713 = vmatpush.msra.mxu0 %v692
        %714 = vmatpush.msra.mxu0 %v691
        %715 = vmatmul.f32.gmra.mxu0 %v566
        %v716 = vpop.f32.mrf.mxu0
        %v717 = vadd.f32 0.0, %v716
        %718 = vmatmul.f32.gmra.mxu0 %v569
        %v719 = vpop.f32.mrf.mxu0
        %v720 = vadd.f32 0.0, %v719
        %721 = vdwg.mxu0
        %s722 = scalar_lea.vmem [#allocation7], 32
        %v723 = vld [vmem:[%s722] sm:$0xff]
        %v724 = vld [vmem:[%s722 + $0x8] sm:$0xff]
        %v726 = vsel %vm631, %v723, 0
        %v729 = vsel %vm631, %v724, 0
        %731 = vmatpush.msra.mxu0 0.0
        %732 = vmatpush.msra.mxu0 0.0
        %733 = vmatpush.msra.mxu0 0.0
        %734 = vmatpush.msra.mxu0 0.0
        %735 = vmatpush.msra.mxu0 0.0
        %736 = vmatpush.msra.mxu0 0.0
        %737 = vmatpush.msra.mxu0 0.0
        %738 = vmatpush.msra.mxu0 0.0
        %739 = vmatpush.msra.mxu0 0.0
        %740 = vmatpush.msra.mxu0 0.0
        %741 = vmatpush.msra.mxu0 0.0
        %742 = vmatpush.msra.mxu0 0.0
        %743 = vmatpush.msra.mxu0 0.0
        %744 = vmatpush.msra.mxu0 0.0
        %745 = vmatpush.msra.mxu0 %v720
        %746 = vmatpush.msra.mxu0 %v717
        %747 = vmatmul.f32.gmra.mxu0 %v726
        %v748 = vpop.f32.mrf.mxu0
        %v749 = vadd.f32 0.0, %v748
        %750 = vmatmul.f32.gmra.mxu0 %v729
        %v751 = vpop.f32.mrf.mxu0
        %v752 = vadd.f32 0.0, %v751
        %753 = vdwg.mxu0
        %v754 = vadd.f32 %v685, %v749
        %v755 = vadd.f32 %v688, %v752
        %v756 = vld [vmem:[#allocation8] sm:$0x1]
        %v758 = vperm.slane %v756, 0
        %v760 = vmul.f32 %v754, %v758
        %v761 = vmul.f32 %v755, %v758
        %v762 = vld [vmem:[#allocation10] sm:$0x1]
        %v764 = vperm.slane %v762, 0
        %v766 = vadd.f32 %v760, %v764
        %v767 = vadd.f32 %v761, %v764
        %v768 = vmax.f32 %v766, 0.0
        %v769 = vmax.f32 %v767, 0.0
        %v770 = vld [vmem:[%s8] sm:$0xff]
        %v771 = vld [vmem:[%s8 + $0x8] sm:$0xff]
        %v772 = vld [vmem:[%s8 + $0x10] sm:$0xff]
        %v773 = vld [vmem:[%s8 + $0x18] sm:$0xff]
        %v774 = vld [vmem:[%s8 + $0x20] sm:$0xff]
        %v775 = vld [vmem:[%s8 + $0x28] sm:$0xff]
        %v776 = vld [vmem:[%s8 + $0x30] sm:$0xff]
        %v777 = vld [vmem:[%s8 + $0x38] sm:$0xff]
        %v778 = vld [vmem:[%s8 + $0x40] sm:$0xff]
        %v779 = vld [vmem:[%s8 + $0x48] sm:$0xff]
        %v780 = vld [vmem:[%s8 + $0x50] sm:$0xff]
        %v781 = vld [vmem:[%s8 + $0x58] sm:$0xff]
        %v782 = vld [vmem:[%s8 + $0x60] sm:$0xff]
        %v783 = vld [vmem:[%s8 + $0x68] sm:$0xff]
        %v784 = vld [vmem:[%s8 + $0x70] sm:$0xff]
        %v785 = vld [vmem:[%s8 + $0x78] sm:$0xff]
        %v787 = vsel %vm564, %v768, 0
        %v790 = vsel %vm564, %v769, 0
        %792 = vmatpush.msra.mxu0 0.0
        %793 = vmatpush.msra.mxu0 0.0
        %794 = vmatpush.msra.mxu0 0.0
        %795 = vmatpush.msra.mxu0 0.0
        %796 = vmatpush.msra.mxu0 0.0
        %797 = vmatpush.msra.mxu0 0.0
        %798 = vmatpush.msra.mxu0 0.0
        %799 = vmatpush.msra.mxu0 0.0
        %800 = vmatpush.msra.mxu0 %v784
        %801 = vmatpush.msra.mxu0 %v782
        %802 = vmatpush.msra.mxu0 %v780
        %803 = vmatpush.msra.mxu0 %v778
        %804 = vmatpush.msra.mxu0 %v776
        %805 = vmatpush.msra.mxu0 %v774
        %806 = vmatpush.msra.mxu0 %v772
        %807 = vmatpush.msra.mxu0 %v770
        %808 = vmatmul.f32.gmra.mxu0 %v787
        %v809 = vpop.f32.mrf.mxu0
        %v810 = vadd.f32 0.0, %v809
        %811 = vmatmul.f32.gmra.mxu0 %v790
        %v812 = vpop.f32.mrf.mxu0
        %v813 = vadd.f32 0.0, %v812
        %814 = vdwg.mxu0
        %815 = vmatpush.msra.mxu0 0.0
        %816 = vmatpush.msra.mxu0 0.0
        %817 = vmatpush.msra.mxu0 0.0
        %818 = vmatpush.msra.mxu0 0.0
        %819 = vmatpush.msra.mxu0 0.0
        %820 = vmatpush.msra.mxu0 0.0
        %821 = vmatpush.msra.mxu0 0.0
        %822 = vmatpush.msra.mxu0 0.0
        %823 = vmatpush.msra.mxu0 %v785
        %824 = vmatpush.msra.mxu0 %v783
        %825 = vmatpush.msra.mxu0 %v781
        %826 = vmatpush.msra.mxu0 %v779
        %827 = vmatpush.msra.mxu0 %v777
        %828 = vmatpush.msra.mxu0 %v775
        %829 = vmatpush.msra.mxu0 %v773
        %830 = vmatpush.msra.mxu0 %v771
        %831 = vmatmul.f32.gmra.mxu0 %v787
        %v832 = vpop.f32.mrf.mxu0
        %v833 = vadd.f32 0.0, %v832
        %834 = vmatmul.f32.gmra.mxu0 %v790
        %v835 = vpop.f32.mrf.mxu0
        %v836 = vadd.f32 0.0, %v835
        %837 = vdwg.mxu0
        %v838 = vld [vmem:[%s9] sm:$0x3]
        %v840 = vperm.slane %v838, 0
        %v841 = vperm.slane %v838, 1
        %v844 = vmul.f32 %v810, %v840
        %v845 = vmul.f32 %v833, %v841
        %v846 = vmul.f32 %v813, %v840
        %v847 = vmul.f32 %v836, %v841
        %v848 = vld [vmem:[%s10] sm:$0x3]
        %v850 = vperm.slane %v848, 0
        %v851 = vperm.slane %v848, 1
        %v854 = vadd.f32 %v844, %v850
        %v855 = vadd.f32 %v845, %v851
        %v856 = vadd.f32 %v846, %v850
        %v857 = vadd.f32 %v847, %v851
        %v858 = vadd.f32 %v854, %v460
        %v859 = vadd.f32 %v855, %v461
        %v860 = vadd.f32 %v856, %v462
        %v861 = vadd.f32 %v857, %v463
        %v862 = vmax.f32 %v858, 0.0
        %v863 = vmax.f32 %v859, 0.0
        %v864 = vmax.f32 %v860, 0.0
        %v865 = vmax.f32 %v861, 0.0
        %866 = vst [vmem:[%s454] sm:$0xff] %v862
        %867 = vst [vmem:[%s454 + $0x8] sm:$0xff] %v863
        %868 = vst [vmem:[%s454 + $0x10] sm:$0xff] %v864
        %869 = vst [vmem:[%s454 + $0x18] sm:$0xff] %v865
        %s870 = sand.u32 %s272, 1
        %s871 = scalar_lea.sflag [#allocation4], %s870
        %s872 = sand.u32 %s272, 1
        %s873 = smul.addr %s872, 32
        %s874 = scalar_lea.vmem [#allocation11], %s873
        // Predicated region
        $region85: #{tpu_custom_call.1} parent=63 // pred_check
          %p875 = pneg %p282
        $region86: #{tpu_custom_call.1} parent=63 // pred_check_branch
          %877 = sbr.rel (%p875) target = $region88
        $region87: #{tpu_custom_call.1} parent=63 // pred_region
          %879 = vsyncadd %s871, 0
          %s880 = smul.addr %s28, 4
          %s881 = smul.addr %s880, 8
          %s882 = scalar_lea.hbm %s11, %s881
          %s883 = sshll.u32 %s874, 4
          %s884 = int_to_ptr.vmem [resolvable:$true] %s883
          %s885 = sshll.u32 %s882, 4
          %s886 = int_to_ptr.hbm [resolvable:$true] %s885
          %891 = dma.vmem_to_hbm [thread:$0]  %s884, 512, %s886, %s871, 256, 256, 16
        $region88: #{tpu_custom_call.1} parent=63 // pred_fallthru
          _
      $region64: #{tpu_custom_call.1} parent=5 // pred_fallthru
        _
      %p892 = scmp.le.s32.totalorder 2, %s23
      // Predicated region
      $region89: #{tpu_custom_call.1} parent=5 // pred_check
        %p893 = pneg %p892
      $region90: #{tpu_custom_call.1} parent=5 // pred_check_branch
        %895 = sbr.rel (%p893) target = $region92
      $region91: #{tpu_custom_call.1} parent=5 // pred_region
        %s896 = ssub.s32 %s23, 2
        // Predicated region
        $region93: #{tpu_custom_call.1} parent=91 // pred_check
          %p897 = pneg %p288
        $region94: #{tpu_custom_call.1} parent=91 // pred_check_branch
          %899 = sbr.rel (%p897) target = $region96
        $region95: #{tpu_custom_call.1} parent=91 // pred_region
          %s900 = sand.u32 %s273, 1
          %s901 = scalar_lea.sflag [#allocation4], %s900
          %s902 = sand.u32 %s273, 1
          %s903 = smul.addr %s902, 32
          %s904 = scalar_lea.vmem [#allocation11], %s903
          %906 = dma.done %s901, 512
        $region96: #{tpu_custom_call.1} parent=91 // pred_fallthru
          _
      $region92: #{tpu_custom_call.1} parent=5 // pred_fallthru
        _
    $region6: #{tpu_custom_call.1} parent=1 // loop_footer
      %s27 = sadd.s32 1, %s23
    $region7: #{tpu_custom_call.1} parent=1 // loop_footer_branch
      %22 = sbr.rel target = $region3
    $region8: #{tpu_custom_call.1} parent=1 // loop_exit
      _
    %907 = vsyncpa [#allocation3], 1
    %s908 = scalar_lea.sflag [#allocation3], 1
    %909 = vsyncpa %s908, 1
    %910 = vsyncpa [#allocation6], 1
    %911 = vsyncpa [#allocation9], 1
    %912 = vsyncpa [#allocation4], 1
    %s913 = scalar_lea.sflag [#allocation4], 1
    %914 = vsyncpa %s913, 1

</llo_original>
